<compile_context>
chip_gen: v7x
topology: tpu7x:2x2x1
jax: 0.10.0
libtpu: 0.0.40
codegen_flags: <defaults>
</compile_context>

<pallas_src>
import jax
import jax.numpy as jnp
from jax.experimental import pallas as pl
from jax.experimental.pallas import tpu as pltpu


def _round_up(x, m):
    return (x + m - 1) // m * m


def _make_kernel(hw, hw_tile, b_tile, ns, needs_mask):
    inv_hw = 1.0 / float(hw)
    n_chunks = hw_tile // 128
    last_tile_base = (ns - 1) * hw_tile

    def kernel(x_ref, w1_ref, b1_ref, w2_ref, b2_ref, out_ref, acc_sum, acc_max):
        s = pl.program_id(1)

        @pl.when(s == 0)
        def _init():
            acc_sum[...] = jnp.zeros_like(acc_sum)
            acc_max[...] = jnp.full_like(acc_max, -jnp.inf)

        def accumulate(last):
            # Fold the tile's lane chunks into (b_tile, C, 128) partials in
            # registers, then a single RMW into the small VMEM accumulators.
            ps = None
            pm = None
            for k in range(n_chunks):
                lo = k * 128
                g0 = last_tile_base + lo  # global HW offset (meaningful iff last)
                if last and g0 >= hw:
                    # Fully padded chunk: zero pad is inert for the sum; skip max.
                    continue
                xk = x_ref[:, :, lo:lo + 128].astype(jnp.float32)
                if last and g0 + 128 > hw:
                    lane = jax.lax.broadcasted_iota(jnp.int32, xk.shape, 2)
                    xk_max = jnp.where(g0 + lane < hw, xk, -jnp.inf)
                else:
                    xk_max = xk
                ps = xk if ps is None else ps + xk
                pm = xk_max if pm is None else jnp.maximum(pm, xk_max)
            acc_sum[...] = acc_sum[...] + ps
            acc_max[...] = jnp.maximum(acc_max[...], pm)

        if not needs_mask:
            accumulate(last=False)
        elif ns == 1:
            accumulate(last=True)
        else:
            # Keep the mask work out of the steady state.
            @pl.when(s < ns - 1)
            def _steady():
                accumulate(last=False)

            @pl.when(s == ns - 1)
            def _last():
                accumulate(last=True)

        @pl.when(s == ns - 1)
        def _finalize():
            avg = jnp.sum(acc_sum[...], axis=-1) * inv_hw   # (b_tile, C)
            mx = jnp.max(acc_max[...], axis=-1)             # (b_tile, C)

            w1 = w1_ref[...].astype(jnp.float32)            # (C, hidden_p)
            b1 = b1_ref[...].astype(jnp.float32)            # (1, hidden_p)
            w2 = w2_ref[...].astype(jnp.float32)            # (hidden_p, cp)
            b2 = b2_ref[...].astype(jnp.float32)            # (1, cp)

            # Shared MLP applied to each pooled vector (epilogue-only, tiny).
            def mlp(v):
                hdn = jnp.dot(v, w1, preferred_element_type=jnp.float32) + b1
                hdn = jnp.maximum(hdn, 0.0)
                return jnp.dot(hdn, w2, preferred_element_type=jnp.float32) + b2

            att = jax.nn.sigmoid(mlp(avg) + mlp(mx))         # (b_tile, cp)
            out_ref[...] = att.reshape(out_ref.shape).astype(out_ref.dtype)

    return kernel


def channel_attention(x, w1, b1, w2, b2):
    """x: (B, C, H, W). Returns (B, C, 1, 1) sigmoid channel-attention weights."""
    b, c, h, w = x.shape
    hidden = w1.shape[1]
    hw = h * w

    # ---- chip-aware VMEM budget ------------------------------------------
    try:
        info = pltpu.get_tpu_info()
        vmem_cap = int(getattr(info, "vmem_capacity_bytes", 64 << 20))
    except Exception:  # conservative fallback (covers v7x's 64 MiB per TC)
        vmem_cap = 64 << 20
    budget = int(min(vmem_cap * 3 // 4, 96 << 20))

    # ---- tiling choices ----------------------------------------------------
    # Batch tile in [1, 8]; keep >= 2 batch blocks when B > 1 so the "parallel"
    # axis can still shard across TensorCores on v7x.
    b_tile = max(1, min(8, (b + 1) // 2))
    b_pad = _round_up(b, b_tile)                 # cdiv-safe batch handling

    cp = _round_up(c, 128)                       # lane-dense output width
    hidden_p = _round_up(hidden, 128)            # lane-dense hidden width

    x_item = jnp.dtype(x.dtype).itemsize
    w_item = jnp.dtype(w1.dtype).itemsize

    # Fixed VMEM: double-buffered weights/biases + lane-partial accumulators
    # + double-buffered output + slack; the rest funds the streamed x buffers.
    fixed = (2 * (c * hidden_p + hidden_p + hidden_p * cp + cp) * w_item
             + 2 * b_tile * c * 128 * 4
             + 2 * b_tile * cp * x_item
             + (2 << 20))
    per_lane = 2 * b_tile * c * x_item           # double-buffered x bytes / lane column
    max_tile = max(128, ((budget - fixed) // max(per_lane, 1)) // 128 * 128)
    hw_tile = int(min(_round_up(hw, 128), 2048, max_tile))
    hw_padded = _round_up(hw, hw_tile)
    ns = hw_padded // hw_tile
    needs_mask = hw_padded != hw

    # ---- wrapper-side plumbing (padding / reshapes) -------------------------
    x3 = x.reshape(b, c, hw)
    if (hw_padded != hw) or (b_pad != b):
        # Zero pad: safe for the sum; the max is masked in-kernel on the last tile.
        x3 = jnp.pad(x3, ((0, b_pad - b), (0, 0), (0, hw_padded - hw)))

    w1p = jnp.pad(w1, ((0, 0), (0, hidden_p - hidden)))
    b1p = jnp.pad(b1, (0, hidden_p - hidden)).reshape(1, hidden_p)
    w2p = jnp.pad(w2, ((0, hidden_p - hidden), (0, cp - c)))
    b2p = jnp.pad(b2, (0, cp - c)).reshape(1, cp)

    kernel = _make_kernel(hw, hw_tile, b_tile, ns, needs_mask)
    grid = (b_pad // b_tile, ns)

    cost = pl.CostEstimate(
        flops=int(2 * b_pad * c * hw
                  + 2 * 2 * b_pad * (c * hidden_p + hidden_p * cp)),
        transcendentals=int(b_pad * cp),
        bytes_accessed=int(x3.size * x_item
                           + (w1p.size + b1p.size + w2p.size + b2p.size) * w_item
                           + b_pad * cp * x_item),
    )

    out = pl.pallas_call(
        kernel,
        out_shape=jax.ShapeDtypeStruct((b_pad, 1, cp), x.dtype),
        grid=grid,
        in_specs=[
            pl.BlockSpec((b_tile, c, hw_tile), lambda bi, si: (bi, 0, si)),  # x (streamed)
            pl.BlockSpec((c, hidden_p), lambda bi, si: (0, 0)),              # w1 (resident)
            pl.BlockSpec((1, hidden_p), lambda bi, si: (0, 0)),              # b1
            pl.BlockSpec((hidden_p, cp), lambda bi, si: (0, 0)),             # w2 (padded)
            pl.BlockSpec((1, cp), lambda bi, si: (0, 0)),                    # b2 (padded)
        ],
        out_specs=pl.BlockSpec((b_tile, 1, cp), lambda bi, si: (bi, 0, 0)),
        scratch_shapes=[
            pltpu.VMEM((b_tile, c, 128), jnp.float32),   # lane-partial running sum
            pltpu.VMEM((b_tile, c, 128), jnp.float32),   # lane-partial running max
        ],
        compiler_params=pltpu.CompilerParams(
            dimension_semantics=("parallel", "arbitrary"),
            vmem_limit_bytes=budget,
        ),
        cost_estimate=cost,
    )(x3, w1p, b1p, w2p, b2p)

    # TODO(synk): on v7x with B == 1, additionally split the spatial stream across
    # the two TensorCores (per-core partials + tiny epilogue) for ~2x bandwidth.
    return out.reshape(b_pad, cp)[:b, :c].reshape(b, c, 1, 1)


def _reference(x, w1, b1, w2, b2):
    b, c, h, w = x.shape
    x3 = x.reshape(b, c, h * w).astype(jnp.float32)
    avg = jnp.mean(x3, axis=-1)
    mx = jnp.max(x3, axis=-1)

    def fc(v):
        hdn = jnp.maximum(v @ w1 + b1, 0.0)
        return hdn @ w2 + b2

    return jax.nn.sigmoid(fc(avg) + fc(mx)).reshape(b, c, 1, 1)


if __name__ == "__main__":
    B, C, H, W = 2, 4, 16, 16
    reduction_ratio = 2
    hidden = C // reduction_ratio

    key = jax.random.PRNGKey(0)
    kx, k1, k2, k3, k4 = jax.random.split(key, 5)

    x = jax.random.normal(kx, (B, C, H, W), dtype=jnp.float32)
    # Deterministic synthetic parameters (shapes follow nn.Linear in the module,
    # stored pre-transposed so the kernel computes v @ w + b directly).
    w1 = jax.random.normal(k1, (C, hidden), dtype=jnp.float32) * 0.5
    b1 = jax.random.normal(k2, (hidden,), dtype=jnp.float32) * 0.1
    w2 = jax.random.normal(k3, (hidden, C), dtype=jnp.float32) * 0.5
    b2 = jax.random.normal(k4, (C,), dtype=jnp.float32) * 0.1

    out = channel_attention(x, w1, b1, w2, b2)
    out = jax.block_until_ready(out)

    ref = _reference(x, w1, b1, w2, b2)
    assert out.shape == (B, C, 1, 1)
    assert jnp.allclose(out, ref, atol=1e-5, rtol=1e-5)

    print("KERNEL_OK")
</pallas_src>

<mosaic_0001>
module attributes {stable_mosaic.version = 11 : i64} {
  func.func @kernel(%arg0: i32, %arg1: i32, %arg2: memref<1x4x256xf32, #tpu.memory_space<vmem>>, %arg3: memref<4x128xf32, #tpu.memory_space<vmem>>, %arg4: memref<1x128xf32, #tpu.memory_space<vmem>>, %arg5: memref<128x128xf32, #tpu.memory_space<vmem>>, %arg6: memref<1x128xf32, #tpu.memory_space<vmem>>, %arg7: memref<1x1x128xf32, #tpu.memory_space<vmem>>, %arg8: memref<1x4x128xf32, #tpu.memory_space<vmem>>, %arg9: memref<1x4x128xf32, #tpu.memory_space<vmem>>) attributes {dimension_semantics = [#tpu.dimension_semantics<parallel>, #tpu.dimension_semantics<arbitrary>], iteration_bounds = array<i64: 2, 1>, scalar_prefetch = 0 : i64, scratch_operands = 2 : i64, tpu.core_type = #tpu.core_type<tc>, window_params = [{transform_indices = @transform_0, window_bounds = array<i64: 1, 4, 256>}, {pipeline_mode = #tpu.pipeline_mode<synchronous>, transform_indices = @transform_1, window_bounds = array<i64: 4, 128>}, {pipeline_mode = #tpu.pipeline_mode<synchronous>, transform_indices = @transform_2, window_bounds = array<i64: 1, 128>}, {pipeline_mode = #tpu.pipeline_mode<synchronous>, transform_indices = @transform_3, window_bounds = array<i64: 128, 128>}, {pipeline_mode = #tpu.pipeline_mode<synchronous>, transform_indices = @transform_4, window_bounds = array<i64: 1, 128>}, {transform_indices = @transform_5, window_bounds = array<i64: 1, 1, 128>}]} {
    %c0_i32 = arith.constant 0 : i32
    %0 = arith.cmpi eq, %arg1, %c0_i32 : i32
    %1 = arith.extui %0 : i1 to i32
    %c0_i32_0 = arith.constant 0 : i32
    %2 = arith.cmpi ne, %1, %c0_i32_0 : i32
    scf.if %2 {
      %cst = arith.constant 0.000000e+00 : f32
      %16 = vector.broadcast %cst : f32 to vector<1x4x128xf32>
      %c0_19 = arith.constant 0 : index
      %c0_20 = arith.constant 0 : index
      %c0_21 = arith.constant 0 : index
      %17 = vector.load %arg8[%c0_19, %c0_20, %c0_21] : memref<1x4x128xf32, #tpu.memory_space<vmem>>, vector<1x4x128xf32>
      tpu.vector_store %arg8[%c0_19, %c0_20, %c0_21], %16 {strides = array<i32>} : memref<1x4x128xf32, #tpu.memory_space<vmem>>, vector<1x4x128xf32>,
      %cst_22 = arith.constant 0xFF800000 : f32
      %18 = vector.broadcast %cst_22 : f32 to vector<1x4x128xf32>
      %c0_23 = arith.constant 0 : index
      %c0_24 = arith.constant 0 : index
      %c0_25 = arith.constant 0 : index
      %19 = vector.load %arg9[%c0_23, %c0_24, %c0_25] : memref<1x4x128xf32, #tpu.memory_space<vmem>>, vector<1x4x128xf32>
      tpu.vector_store %arg9[%c0_23, %c0_24, %c0_25], %18 {strides = array<i32>} : memref<1x4x128xf32, #tpu.memory_space<vmem>>, vector<1x4x128xf32>,
    } else {
    }
    %c0 = arith.constant 0 : index
    %c0_1 = arith.constant 0 : index
    %c0_2 = arith.constant 0 : index
    %3 = vector.load %arg2[%c0, %c0_1, %c0_2] : memref<1x4x256xf32, #tpu.memory_space<vmem>>, vector<1x4x128xf32>
    %c0_3 = arith.constant 0 : index
    %c0_4 = arith.constant 0 : index
    %c128 = arith.constant 128 : index
    %4 = vector.load %arg2[%c0_3, %c0_4, %c128] : memref<1x4x256xf32, #tpu.memory_space<vmem>>, vector<1x4x128xf32>
    %5 = arith.addf %3, %4 : vector<1x4x128xf32>
    %6 = arith.maximumf %3, %4 : vector<1x4x128xf32>
    %c0_5 = arith.constant 0 : index
    %c0_6 = arith.constant 0 : index
    %c0_7 = arith.constant 0 : index
    %7 = vector.load %arg8[%c0_5, %c0_6, %c0_7] : memref<1x4x128xf32, #tpu.memory_space<vmem>>, vector<1x4x128xf32>
    %8 = arith.addf %7, %5 : vector<1x4x128xf32>
    %c0_8 = arith.constant 0 : index
    %c0_9 = arith.constant 0 : index
    %c0_10 = arith.constant 0 : index
    %9 = vector.load %arg8[%c0_8, %c0_9, %c0_10] : memref<1x4x128xf32, #tpu.memory_space<vmem>>, vector<1x4x128xf32>
    tpu.vector_store %arg8[%c0_8, %c0_9, %c0_10], %8 {strides = array<i32>} : memref<1x4x128xf32, #tpu.memory_space<vmem>>, vector<1x4x128xf32>,
    %c0_11 = arith.constant 0 : index
    %c0_12 = arith.constant 0 : index
    %c0_13 = arith.constant 0 : index
    %10 = vector.load %arg9[%c0_11, %c0_12, %c0_13] : memref<1x4x128xf32, #tpu.memory_space<vmem>>, vector<1x4x128xf32>
    %11 = arith.maximumf %10, %6 : vector<1x4x128xf32>
    %c0_14 = arith.constant 0 : index
    %c0_15 = arith.constant 0 : index
    %c0_16 = arith.constant 0 : index
    %12 = vector.load %arg9[%c0_14, %c0_15, %c0_16] : memref<1x4x128xf32, #tpu.memory_space<vmem>>, vector<1x4x128xf32>
    tpu.vector_store %arg9[%c0_14, %c0_15, %c0_16], %11 {strides = array<i32>} : memref<1x4x128xf32, #tpu.memory_space<vmem>>, vector<1x4x128xf32>,
    %c0_i32_17 = arith.constant 0 : i32
    %13 = arith.cmpi eq, %arg1, %c0_i32_17 : i32
    %14 = arith.extui %13 : i1 to i32
    %c0_i32_18 = arith.constant 0 : i32
    %15 = arith.cmpi ne, %14, %c0_i32_18 : i32
    scf.if %15 {
      %c0_19 = arith.constant 0 : index
      %c0_20 = arith.constant 0 : index
      %c0_21 = arith.constant 0 : index
      %16 = vector.load %arg8[%c0_19, %c0_20, %c0_21] : memref<1x4x128xf32, #tpu.memory_space<vmem>>, vector<1x4x128xf32>
      %cst = arith.constant dense<0.000000e+00> : vector<1x4xf32>
      %17 = vector.multi_reduction <add>, %16, %cst [2] : vector<1x4x128xf32> to vector<1x4xf32>
      %cst_22 = arith.constant 3.906250e-03 : f32
      %18 = vector.broadcast %cst_22 : f32 to vector<1x4xf32>
      %19 = arith.mulf %17, %18 : vector<1x4xf32>
      %c0_23 = arith.constant 0 : index
      %c0_24 = arith.constant 0 : index
      %c0_25 = arith.constant 0 : index
      %20 = vector.load %arg9[%c0_23, %c0_24, %c0_25] : memref<1x4x128xf32, #tpu.memory_space<vmem>>, vector<1x4x128xf32>
      %cst_26 = arith.constant dense<0xFF800000> : vector<1x4xf32>
      %21 = vector.multi_reduction <maximumf>, %20, %cst_26 [2] : vector<1x4x128xf32> to vector<1x4xf32>
      %c0_27 = arith.constant 0 : index
      %c0_28 = arith.constant 0 : index
      %22 = vector.load %arg3[%c0_27, %c0_28] : memref<4x128xf32, #tpu.memory_space<vmem>>, vector<4x128xf32>
      %c0_29 = arith.constant 0 : index
      %c0_30 = arith.constant 0 : index
      %23 = vector.load %arg4[%c0_29, %c0_30] : memref<1x128xf32, #tpu.memory_space<vmem>>, vector<1x128xf32>
      %c0_31 = arith.constant 0 : index
      %c0_32 = arith.constant 0 : index
      %24 = vector.load %arg5[%c0_31, %c0_32] : memref<128x128xf32, #tpu.memory_space<vmem>>, vector<128x128xf32>
      %c0_33 = arith.constant 0 : index
      %c0_34 = arith.constant 0 : index
      %25 = vector.load %arg6[%c0_33, %c0_34] : memref<1x128xf32, #tpu.memory_space<vmem>>, vector<1x128xf32>
      %cst_35 = arith.constant dense<0.000000e+00> : vector<1x128xf32>
      %26 = tpu.matmul %19, %22, %cst_35 {dimension_numbers = #tpu.dot_dimension_numbers<[1], [0], [0], [1], [0, 0, 1, 1], [], []>} : vector<1x4xf32>, vector<4x128xf32>, vector<1x128xf32> -> vector<1x128xf32>
      %27 = arith.addf %26, %23 : vector<1x128xf32>
      %cst_36 = arith.constant 0.000000e+00 : f32
      %28 = vector.broadcast %cst_36 : f32 to vector<1x128xf32>
      %29 = arith.maximumf %27, %28 : vector<1x128xf32>
      %cst_37 = arith.constant dense<0.000000e+00> : vector<1x128xf32>
      %30 = tpu.matmul %29, %24, %cst_37 {dimension_numbers = #tpu.dot_dimension_numbers<[1], [0], [0], [1], [0, 0, 1, 1], [], []>} : vector<1x128xf32>, vector<128x128xf32>, vector<1x128xf32> -> vector<1x128xf32>
      %31 = arith.addf %30, %25 : vector<1x128xf32>
      %cst_38 = arith.constant dense<0.000000e+00> : vector<1x128xf32>
      %32 = tpu.matmul %21, %22, %cst_38 {dimension_numbers = #tpu.dot_dimension_numbers<[1], [0], [0], [1], [0, 0, 1, 1], [], []>} : vector<1x4xf32>, vector<4x128xf32>, vector<1x128xf32> -> vector<1x128xf32>
      %33 = arith.addf %32, %23 : vector<1x128xf32>
      %cst_39 = arith.constant 0.000000e+00 : f32
      %34 = vector.broadcast %cst_39 : f32 to vector<1x128xf32>
      %35 = arith.maximumf %33, %34 : vector<1x128xf32>
      %cst_40 = arith.constant dense<0.000000e+00> : vector<1x128xf32>
      %36 = tpu.matmul %35, %24, %cst_40 {dimension_numbers = #tpu.dot_dimension_numbers<[1], [0], [0], [1], [0, 0, 1, 1], [], []>} : vector<1x128xf32>, vector<128x128xf32>, vector<1x128xf32> -> vector<1x128xf32>
      %37 = arith.addf %36, %25 : vector<1x128xf32>
      %38 = arith.addf %31, %37 : vector<1x128xf32>
      %39 = arith.negf %38 : vector<1x128xf32>
      %40 = math.exp %39 : vector<1x128xf32>
      %cst_41 = arith.constant 1.000000e+00 : f32
      %41 = vector.broadcast %cst_41 : f32 to vector<1x128xf32>
      %42 = arith.addf %41, %40 : vector<1x128xf32>
      %43 = arith.divf %41, %42 : vector<1x128xf32>
      %44 = vector.shape_cast %43 : vector<1x128xf32> to vector<1x1x128xf32>
      %c0_42 = arith.constant 0 : index
      %c0_43 = arith.constant 0 : index
      %c0_44 = arith.constant 0 : index
      %45 = vector.load %arg7[%c0_42, %c0_43, %c0_44] : memref<1x1x128xf32, #tpu.memory_space<vmem>>, vector<1x1x128xf32>
      tpu.vector_store %arg7[%c0_42, %c0_43, %c0_44], %44 {strides = array<i32>} : memref<1x1x128xf32, #tpu.memory_space<vmem>>, vector<1x1x128xf32>,
    } else {
    }
    return
  }
  func.func @transform_0(%arg0: i32, %arg1: i32) -> (i32, i32, i32) {
    %c0_i32 = arith.constant 0 : i32
    %c0_i32_0 = arith.constant 0 : i32
    return %arg0, %c0_i32, %arg1 : i32, i32, i32
  }
  func.func @transform_1(%arg0: i32, %arg1: i32) -> (i32, i32) {
    %c0_i32 = arith.constant 0 : i32
    %c0_i32_0 = arith.constant 0 : i32
    %c0_i32_1 = arith.constant 0 : i32
    return %c0_i32, %c0_i32_0 : i32, i32
  }
  func.func @transform_2(%arg0: i32, %arg1: i32) -> (i32, i32) {
    %c0_i32 = arith.constant 0 : i32
    %c0_i32_0 = arith.constant 0 : i32
    %c0_i32_1 = arith.constant 0 : i32
    return %c0_i32, %c0_i32_0 : i32, i32
  }
  func.func @transform_3(%arg0: i32, %arg1: i32) -> (i32, i32) {
    %c0_i32 = arith.constant 0 : i32
    %c0_i32_0 = arith.constant 0 : i32
    %c0_i32_1 = arith.constant 0 : i32
    return %c0_i32, %c0_i32_0 : i32, i32
  }
  func.func @transform_4(%arg0: i32, %arg1: i32) -> (i32, i32) {
    %c0_i32 = arith.constant 0 : i32
    %c0_i32_0 = arith.constant 0 : i32
    %c0_i32_1 = arith.constant 0 : i32
    return %c0_i32, %c0_i32_0 : i32, i32
  }
  func.func @transform_5(%arg0: i32, %arg1: i32) -> (i32, i32, i32) {
    %c0_i32 = arith.constant 0 : i32
    %c0_i32_0 = arith.constant 0 : i32
    %c0_i32_1 = arith.constant 0 : i32
    return %arg0, %c0_i32, %c0_i32_0 : i32, i32, i32
  }
}

</mosaic_0001>

<llo_original>
// kernel: tpu_custom_call.1
$region0: #{tpu_custom_call.1}
  #allocation0 [shape = 'u32[]', space=smem, size = 0x4, offset = 0x4, fixed_abs, tag = 'smem constant byte address 0x4 - core index']
  #allocation1 [shape = 'u32[144,128]{1,0:T(1,128)}', space=vmem, size = 0x12000, scoped, tag = 'internal scratch']
  #allocation2 [shape = 'f32[1,4,128]{2,1,0:T(4,128)}', space=vmem, size = 0x800, scoped, tag = 'scratch operand']
  #allocation3 [shape = 'f32[1,4,128]{2,1,0:T(4,128)}', space=vmem, size = 0x800, scoped, tag = 'scratch operand']
  %s0 = inlined_call_operand.hbm [shape: f32[2,4,256], index: 0, kind: input, shape index: {}]
  %s1 = inlined_call_operand.hbm [shape: f32[4,128], index: 1, kind: input, shape index: {}]
  %s2 = inlined_call_operand.vmem [shape: f32[1,128], index: 2, kind: input, shape index: {}]
  %s3 = inlined_call_operand.hbm [shape: f32[128,128], index: 3, kind: input, shape index: {}]
  %s4 = inlined_call_operand.vmem [shape: f32[1,128], index: 4, kind: input, shape index: {}]
  %s5 = inlined_call_operand.hbm [shape: f32[2,1,128], index: 5, kind: output, shape index: {}]
  %s6 = sld [smem:[#allocation0]]
  $region73: #{tpu_custom_call.1} parent=0
    _
  %s8 = ssub.s32 1, %s6
  %s9 = scalar_select 0, %s8, %s6
  $region1: #{tpu_custom_call.1} parent=0
    #allocation4 [shape = 'u8[8192]{0}', space=vmem, size = 0x2000, scoped, tag = 'input window, operand 0']
    #allocation5 [shape = 's32[2]{0}', space=sflag, size = 0x8, scoped, tag = 'scoped memory for tpu_custom_call.1']
    #allocation6 [shape = 's32[2]{0}', space=sflag, size = 0x8, scoped, tag = 'scoped memory for tpu_custom_call.1']
    #allocation7 [shape = 'u8[2048]{0}', space=vmem, size = 0x800, scoped, tag = 'input window, operand 1, single buffered']
    #allocation8 [shape = 's32[1]{0}', space=sflag, size = 0x4, scoped, tag = 'scoped memory for tpu_custom_call.1']
    #allocation9 [shape = 'u8[65536]{0}', space=vmem, size = 0x10000, scoped, tag = 'input window, operand 3, single buffered']
    #allocation10 [shape = 'u8[1024]{0}', space=vmem, size = 0x400, scoped, tag = 'output window, operand 0']
    %10 = vsyncpa [#allocation5], 0
    %s11 = scalar_lea.sflag [#allocation5], 1
    %12 = vsyncpa %s11, 0
    %13 = vsyncpa [#allocation8], 0
    %14 = vsyncpa [#allocation6], 0
    %s15 = scalar_lea.sflag [#allocation6], 1
    %16 = vsyncpa %s15, 0
    loop: start=0, step=1, limit=4
    $region2: #{tpu_custom_call.1} parent=1 // loop_pre_header
      _
    $region3: #{tpu_custom_call.1} parent=1 // loop_header
      %s18 = sphi 0, %s22
      %p19 = scmp.ge.s32.totalorder %s18, 4
      %s25 = sphi 0, %s37
      %s26 = sphi 0, %s33
      %s27 = sphi 0, %s25
      %s28 = sphi 0, %s26
      %s29 = sphi 0, %s27
      %s30 = sphi 0, %s28
      %s42 = sphi 0, %s44
      %s45 = sphi 0, %s42
      %s46 = sphi 0, %s45
      %s62 = sphi 0, %s46
      %s66 = sphi 0, %s66
      %s68 = sphi 0, %s66
      %s69 = sphi 0, %s68
      %s83 = sphi 0, %s69
      %s87 = sphi 0, %s87
      %s89 = sphi 0, %s87
      %s90 = sphi 0, %s89
      %s104 = sphi 0, %s90
      %s108 = sphi 0, %s108
      %s110 = sphi 0, %s108
      %s111 = sphi 0, %s110
      %s125 = sphi 0, %s111
      %s129 = sphi 0, %s129
      %s131 = sphi 0, %s129
      %s132 = sphi 0, %s131
      %s146 = sphi 0, %s132
      %s152 = sphi 0, %s154
      %s155 = sphi 0, %s152
      %s156 = sphi 0, %s155
      %s172 = sphi 0, %s156
    $region4: #{tpu_custom_call.1} parent=1 // loop_header_branch
      %21 = sbr.rel (%p19) target = $region8
    $region5: #{tpu_custom_call.1} parent=1 // loop_body
      %s23 = ssub.s32 %s18, 1
      %s24 = ssub.s32 %s18, 2
      %s31 = sadd.s32 1, %s26
      %p32 = scmp.ge.s32.totalorder %s31, 1
      %s33 = scalar_select %p32, 0, %s31
      %s34 = sadd.s32 1, %s25
      %s35 = scalar_select %p32, %s34, %s25
      %p36 = scmp.ge.s32.totalorder %s35, 2
      %s37 = scalar_select %p36, 0, %s35
      %s38 = ssub.s32 %s25, %s37
      %s39 = ssub.s32 %s26, %s33
      %s40 = sor.u32 %s38, %s39
      %p41 = scmp.eq.s32.totalorder %s40, 0
      %s43 = sadd.s32 %s42, 1
      %s44 = scalar_select %p41, %s42, %s43
      %p47 = pneg %p41
      %p48 = scmp.eq.s32.totalorder %s18, 1
      %p49 = por %p47, %p48
      %p50 = scmp.ne.s32.totalorder %s42, %s45
      %p51 = scmp.eq.s32.totalorder %s18, 0
      %p52 = por %p50, %p51
      %p53 = scmp.ne.s32.totalorder %s42, %s45
      %p54 = scmp.eq.s32.totalorder %s23, 1
      %p55 = por %p53, %p54
      %p56 = scmp.ne.s32.totalorder %s45, %s46
      %p57 = scmp.eq.s32.totalorder %s23, 0
      %p58 = por %p56, %p57
      %p59 = scmp.ne.s32.totalorder %s45, %s46
      %p60 = scmp.eq.s32.totalorder %s24, 1
      %p61 = por %p59, %p60
      %p63 = scmp.ne.s32.totalorder %s46, %s62
      %p64 = scmp.eq.s32.totalorder %s24, 0
      %p65 = por %p63, %p64
      %s67 = sadd.s32 %s66, 1
      %p70 = scmp.eq.s32.totalorder %s18, 1
      %p71 = scmp.ne.s32.totalorder %s66, %s68
      %p72 = scmp.eq.s32.totalorder %s18, 0
      %p73 = por %p71, %p72
      %p74 = scmp.ne.s32.totalorder %s66, %s68
      %p75 = scmp.eq.s32.totalorder %s23, 1
      %p76 = por %p74, %p75
      %p77 = scmp.ne.s32.totalorder %s68, %s69
      %p78 = scmp.eq.s32.totalorder %s23, 0
      %p79 = por %p77, %p78
      %p80 = scmp.ne.s32.totalorder %s68, %s69
      %p81 = scmp.eq.s32.totalorder %s24, 1
      %p82 = por %p80, %p81
      %p84 = scmp.ne.s32.totalorder %s69, %s83
      %p85 = scmp.eq.s32.totalorder %s24, 0
      %p86 = por %p84, %p85
      %s88 = sadd.s32 %s87, 1
      %p91 = scmp.eq.s32.totalorder %s18, 1
      %p92 = scmp.ne.s32.totalorder %s87, %s89
      %p93 = scmp.eq.s32.totalorder %s18, 0
      %p94 = por %p92, %p93
      %p95 = scmp.ne.s32.totalorder %s87, %s89
      %p96 = scmp.eq.s32.totalorder %s23, 1
      %p97 = por %p95, %p96
      %p98 = scmp.ne.s32.totalorder %s89, %s90
      %p99 = scmp.eq.s32.totalorder %s23, 0
      %p100 = por %p98, %p99
      %p101 = scmp.ne.s32.totalorder %s89, %s90
      %p102 = scmp.eq.s32.totalorder %s24, 1
      %p103 = por %p101, %p102
      %p105 = scmp.ne.s32.totalorder %s90, %s104
      %p106 = scmp.eq.s32.totalorder %s24, 0
      %p107 = por %p105, %p106
      %s109 = sadd.s32 %s108, 1
      %p112 = scmp.eq.s32.totalorder %s18, 1
      %p113 = scmp.ne.s32.totalorder %s108, %s110
      %p114 = scmp.eq.s32.totalorder %s18, 0
      %p115 = por %p113, %p114
      %p116 = scmp.ne.s32.totalorder %s108, %s110
      %p117 = scmp.eq.s32.totalorder %s23, 1
      %p118 = por %p116, %p117
      %p119 = scmp.ne.s32.totalorder %s110, %s111
      %p120 = scmp.eq.s32.totalorder %s23, 0
      %p121 = por %p119, %p120
      %p122 = scmp.ne.s32.totalorder %s110, %s111
      %p123 = scmp.eq.s32.totalorder %s24, 1
      %p124 = por %p122, %p123
      %p126 = scmp.ne.s32.totalorder %s111, %s125
      %p127 = scmp.eq.s32.totalorder %s24, 0
      %p128 = por %p126, %p127
      %s130 = sadd.s32 %s129, 1
      %p133 = scmp.eq.s32.totalorder %s18, 1
      %p134 = scmp.ne.s32.totalorder %s129, %s131
      %p135 = scmp.eq.s32.totalorder %s18, 0
      %p136 = por %p134, %p135
      %p137 = scmp.ne.s32.totalorder %s129, %s131
      %p138 = scmp.eq.s32.totalorder %s23, 1
      %p139 = por %p137, %p138
      %p140 = scmp.ne.s32.totalorder %s131, %s132
      %p141 = scmp.eq.s32.totalorder %s23, 0
      %p142 = por %p140, %p141
      %p143 = scmp.ne.s32.totalorder %s131, %s132
      %p144 = scmp.eq.s32.totalorder %s24, 1
      %p145 = por %p143, %p144
      %p147 = scmp.ne.s32.totalorder %s132, %s146
      %p148 = scmp.eq.s32.totalorder %s24, 0
      %p149 = por %p147, %p148
      %s150 = ssub.s32 %s25, %s37
      %p151 = scmp.eq.s32.totalorder %s150, 0
      %s153 = sadd.s32 %s152, 1
      %s154 = scalar_select %p151, %s152, %s153
      %p157 = pneg %p151
      %p158 = scmp.eq.s32.totalorder %s18, 1
      %p159 = por %p157, %p158
      %p160 = scmp.ne.s32.totalorder %s152, %s155
      %p161 = scmp.eq.s32.totalorder %s18, 0
      %p162 = por %p160, %p161
      %p163 = scmp.ne.s32.totalorder %s152, %s155
      %p164 = scmp.eq.s32.totalorder %s23, 1
      %p165 = por %p163, %p164
      %p166 = scmp.ne.s32.totalorder %s155, %s156
      %p167 = scmp.eq.s32.totalorder %s23, 0
      %p168 = por %p166, %p167
      %p169 = scmp.ne.s32.totalorder %s155, %s156
      %p170 = scmp.eq.s32.totalorder %s24, 1
      %p171 = por %p169, %p170
      %p173 = scmp.ne.s32.totalorder %s156, %s172
      %p174 = scmp.eq.s32.totalorder %s24, 0
      %p175 = por %p173, %p174
      %p176 = scmp.le.s32.totalorder 1, %s18
      %p177 = scmp.lt.s32.totalorder %s18, 3
      %p178 = pnand %p176, %p177
      %p179 = pneg %p178
      // Predicated region
      $region9: #{tpu_custom_call.1} parent=5 // pred_check
        _
      $region10: #{tpu_custom_call.1} parent=5 // pred_check_branch
        %181 = sbr.rel (%p178) target = $region12
      $region11: #{tpu_custom_call.1} parent=5 // pred_region
        %s182 = ssub.s32 %s18, 1
        // Predicated region
        $region13: #{tpu_custom_call.1} parent=11 // pred_check
          %p183 = pneg %p79
        $region14: #{tpu_custom_call.1} parent=11 // pred_check_branch
          %185 = sbr.rel (%p183) target = $region16
        $region15: #{tpu_custom_call.1} parent=11 // pred_region
          %s187 = ssub.s32 64, 64
          %188 = vsyncadd [#allocation8], %s187
          %s190 = sshll.u32 [#allocation7], 4
          %s191 = int_to_ptr.vmem [resolvable:$true] %s190
          %193 = dma.hbm_to_vmem [thread:$0]  %s1, 64, %s191, [#allocation8]
        $region16: #{tpu_custom_call.1} parent=11 // pred_fallthru
          _
        // Predicated region
        $region17: #{tpu_custom_call.1} parent=11 // pred_check
          %p194 = pneg %p100
        $region18: #{tpu_custom_call.1} parent=11 // pred_check_branch
          %196 = sbr.rel (%p194) target = $region20
        $region19: #{tpu_custom_call.1} parent=11 // pred_region
          _
        $region20: #{tpu_custom_call.1} parent=11 // pred_fallthru
          _
        // Predicated region
        $region21: #{tpu_custom_call.1} parent=11 // pred_check
          %p197 = pneg %p121
        $region22: #{tpu_custom_call.1} parent=11 // pred_check_branch
          %199 = sbr.rel (%p197) target = $region24
        $region23: #{tpu_custom_call.1} parent=11 // pred_region
          %s201 = ssub.s32 2048, 2048
          %202 = vsyncadd [#allocation8], %s201
          %s203 = sshll.u32 [#allocation9], 4
          %s204 = int_to_ptr.vmem [resolvable:$true] %s203
          %209 = dma.hbm_to_vmem [thread:$0]  %s3, 2048, %s204, [#allocation8], 128, 128, 8
        $region24: #{tpu_custom_call.1} parent=11 // pred_fallthru
          _
        // Predicated region
        $region25: #{tpu_custom_call.1} parent=11 // pred_check
          %p210 = pneg %p142
        $region26: #{tpu_custom_call.1} parent=11 // pred_check_branch
          %212 = sbr.rel (%p210) target = $region28
        $region27: #{tpu_custom_call.1} parent=11 // pred_region
          _
        $region28: #{tpu_custom_call.1} parent=11 // pred_fallthru
          _
      $region12: #{tpu_custom_call.1} parent=5 // pred_fallthru
        _
      %p213 = scmp.lt.s32.totalorder %s18, 2
      // Predicated region
      $region29: #{tpu_custom_call.1} parent=5 // pred_check
        %p214 = pneg %p213
      $region30: #{tpu_custom_call.1} parent=5 // pred_check_branch
        %216 = sbr.rel (%p214) target = $region32
      $region31: #{tpu_custom_call.1} parent=5 // pred_region
        // Predicated region
        $region33: #{tpu_custom_call.1} parent=31 // pred_check
          %p217 = pneg %p52
        $region34: #{tpu_custom_call.1} parent=31 // pred_check_branch
          %219 = sbr.rel (%p217) target = $region36
        $region35: #{tpu_custom_call.1} parent=31 // pred_region
          %s220 = sand.u32 %s42, 1
          %s221 = scalar_lea.sflag [#allocation5], %s220
          %s222 = sand.u32 %s42, 1
          %s223 = smul.addr %s222, 8
          %s224 = scalar_lea.vmem [#allocation4], %s223
          %s225 = smul.u32 2, %s26
          %s227 = ssub.s32 128, 128
          %228 = vsyncadd %s221, %s227
          %s229 = smul.addr %s25, 2
          %s230 = sadd.s32 %s225, %s229
          %s231 = smul.addr %s230, 64
          %s232 = scalar_lea.hbm %s0, %s231
          %s234 = sshll.u32 %s224, 4
          %s235 = int_to_ptr.vmem [resolvable:$true] %s234
          %237 = dma.hbm_to_vmem [thread:$0]  %s232, 128, %s235, %s221
        $region36: #{tpu_custom_call.1} parent=31 // pred_fallthru
          _
      $region32: #{tpu_custom_call.1} parent=5 // pred_fallthru
        _
      %p238 = scmp.le.s32.totalorder 1, %s18
      %p239 = scmp.lt.s32.totalorder %s18, 3
      %p240 = pnand %p238, %p239
      %p241 = pneg %p240
      // Predicated region
      $region37: #{tpu_custom_call.1} parent=5 // pred_check
        _
      $region38: #{tpu_custom_call.1} parent=5 // pred_check_branch
        %243 = sbr.rel (%p240) target = $region40
      $region39: #{tpu_custom_call.1} parent=5 // pred_region
        %s244 = ssub.s32 %s18, 1
        %s245 = sand.u32 %s45, 1
        %s246 = scalar_lea.sflag [#allocation5], %s245
        %s247 = sand.u32 %s45, 1
        %s248 = smul.addr %s247, 8
        %s249 = scalar_lea.vmem [#allocation4], %s248
        // Predicated region
        $region41: #{tpu_custom_call.1} parent=39 // pred_check
          %p250 = pneg %p58
        $region42: #{tpu_custom_call.1} parent=39 // pred_check_branch
          %252 = sbr.rel (%p250) target = $region44
        $region43: #{tpu_custom_call.1} parent=39 // pred_region
          %253 = dma.done %s246, 128
        $region44: #{tpu_custom_call.1} parent=39 // pred_fallthru
          _
        // Predicated region
        $region45: #{tpu_custom_call.1} parent=39 // pred_check
          %p254 = pneg %p79
        $region46: #{tpu_custom_call.1} parent=39 // pred_check_branch
          %256 = sbr.rel (%p254) target = $region48
        $region47: #{tpu_custom_call.1} parent=39 // pred_region
          %257 = dma.done [#allocation8], 64
        $region48: #{tpu_custom_call.1} parent=39 // pred_fallthru
          _
        // Predicated region
        $region49: #{tpu_custom_call.1} parent=39 // pred_check
          %p258 = pneg %p121
        $region50: #{tpu_custom_call.1} parent=39 // pred_check_branch
          %260 = sbr.rel (%p258) target = $region52
        $region51: #{tpu_custom_call.1} parent=39 // pred_region
          %261 = dma.done [#allocation8], 2048
        $region52: #{tpu_custom_call.1} parent=39 // pred_fallthru
          _
        %s262 = sand.u32 %s45, 1
        %s263 = scalar_lea.sflag [#allocation5], %s262
        %s264 = sand.u32 %s45, 1
        %s265 = smul.addr %s264, 8
        %s266 = scalar_lea.vmem [#allocation4], %s265
        %p267 = pneg %p58
        %p268 = pneg %p55
        %p269 = pneg %p79
        %p270 = pneg %p76
        %p271 = pneg %p100
        %p272 = pneg %p97
        %p273 = pneg %p121
        %p274 = pneg %p118
        %p275 = pneg %p142
        %p276 = pneg %p139
        %p277 = pneg %p168
        %p278 = pneg %p165
        %s279 = sand.u32 %s155, 1
        %s280 = scalar_lea.sflag [#allocation6], %s279
        %s281 = sand.u32 %s155, 1
        %s282 = scalar_lea.vmem [#allocation10], %s281
        %s283 = smul.u32 2, %s28
        %p284 = scmp.eq.s32.totalorder %s28, 0
        // Predicated region
        $region53: #{tpu_custom_call.1} parent=39 // pred_check
          %p285 = pneg %p284
        $region54: #{tpu_custom_call.1} parent=39 // pred_check_branch
          %287 = sbr.rel (%p285) target = $region56
        $region55: #{tpu_custom_call.1} parent=39 // pred_region
          %288 = vst [vmem:[#allocation2] sm:$0xf] 0.0
          %289 = vst [vmem:[#allocation3] sm:$0xf] -inf
        $region56: #{tpu_custom_call.1} parent=39 // pred_fallthru
          _
        %v290 = vld [vmem:[%s249] sm:$0xf]
        %v291 = vld [vmem:[%s249 + $0x4] sm:$0xf]
        %v292 = vadd.f32 %v290, %v291
        %v293 = vmax.f32 %v290, %v291
        %v294 = vld [vmem:[#allocation2] sm:$0xf]
        %v295 = vadd.f32 %v294, %v292
        %296 = vst [vmem:[#allocation2] sm:$0xf] %v295
        %v297 = vld [vmem:[#allocation3] sm:$0xf]
        %v298 = vmax.f32 %v297, %v293
        %299 = vst [vmem:[#allocation3] sm:$0xf] %v298
        // Predicated region
        $region57: #{tpu_custom_call.1} parent=39 // pred_check
          %p300 = pneg %p284
        $region58: #{tpu_custom_call.1} parent=39 // pred_check_branch
          %302 = sbr.rel (%p300) target = $region60
        $region59: #{tpu_custom_call.1} parent=39 // pred_region
          %v303 = vld [vmem:[#allocation2] sm:$0xf]
          %vm304 = vcmask 1043456
          %v305 = vsel %vm304, %v303, 0.0
          %306 = vadd.xlane.f32.xlu0 %v305
          %v307 = vpop.xlane.xlu0 %306
          %v308 = vmul.f32 %v307, 0.00390625
          %v309 = vld [vmem:[#allocation3] sm:$0xf]
          %v310 = vsel %vm304, %v309, -inf
          %311 = vmax.xlane.f32.xlu0 %v310
          %v312 = vpop.xlane.xlu0 %311
          %v313 = vld [vmem:[#allocation7] sm:$0xf]
          %v314 = vld [vmem:[%s2] sm:$0x1]
          %v315 = vld [vmem:[#allocation9] sm:$0xff]
          %v316 = vld [vmem:[#allocation9 + $0x8] sm:$0xff]
          %v317 = vld [vmem:[#allocation9 + $0x10] sm:$0xff]
          %v318 = vld [vmem:[#allocation9 + $0x18] sm:$0xff]
          %v319 = vld [vmem:[#allocation9 + $0x20] sm:$0xff]
          %v320 = vld [vmem:[#allocation9 + $0x28] sm:$0xff]
          %v321 = vld [vmem:[#allocation9 + $0x30] sm:$0xff]
          %v322 = vld [vmem:[#allocation9 + $0x38] sm:$0xff]
          %v323 = vld [vmem:[#allocation9 + $0x40] sm:$0xff]
          %v324 = vld [vmem:[#allocation9 + $0x48] sm:$0xff]
          %v325 = vld [vmem:[#allocation9 + $0x50] sm:$0xff]
          %v326 = vld [vmem:[#allocation9 + $0x58] sm:$0xff]
          %v327 = vld [vmem:[#allocation9 + $0x60] sm:$0xff]
          %v328 = vld [vmem:[#allocation9 + $0x68] sm:$0xff]
          %v329 = vld [vmem:[#allocation9 + $0x70] sm:$0xff]
          %v330 = vld [vmem:[#allocation9 + $0x78] sm:$0xff]
          %v331 = vld [vmem:[%s4] sm:$0x1]
          %v333 = vlaneseq
          %v334 = vand.u32 %v333, 127
          %v335 = vlaneseq
          %v336 = vshrl.u32 %v335, 7
          %v337 = vsub.s32 %v334, %v336
          %v338 = vrot.slane %v308, %v337
          %vm339 = vcmask 31744
          %v340 = vsel %vm339, %v338, 0
          %v343 = vsel %vm304, %v313, 0
          %345 = vmatprep.subr.mxu0 0.0
          %346 = vmatpush1.msra.mxu0 %v343
          %347 = vmatprep.subr.mxu0 0.0
          %348 = vmatpush1.msra.mxu0 0.0
          %349 = vmatprep.subr.mxu0 0.0
          %350 = vmatpush1.msra.mxu0 0.0
          %351 = vmatprep.subr.mxu0 0.0
          %352 = vmatpush1.msra.mxu0 0.0
          %353 = vmatprep.subr.mxu0 0.0
          %354 = vmatpush1.msra.mxu0 0.0
          %355 = vmatprep.subr.mxu0 0.0
          %356 = vmatpush1.msra.mxu0 0.0
          %357 = vmatprep.subr.mxu0 0.0
          %358 = vmatpush1.msra.mxu0 0.0
          %359 = vmatprep.subr.mxu0 0.0
          %360 = vmatpush1.msra.mxu0 0.0
          %361 = vmatprep.subr.mxu0 0.0
          %362 = vmatpush1.msra.mxu0 0.0
          %363 = vmatprep.subr.mxu0 0.0
          %364 = vmatpush1.msra.mxu0 0.0
          %365 = vmatprep.subr.mxu0 0.0
          %366 = vmatpush1.msra.mxu0 0.0
          %367 = vmatprep.subr.mxu0 0.0
          %368 = vmatpush1.msra.mxu0 0.0
          %369 = vmatprep.subr.mxu0 0.0
          %370 = vmatpush1.msra.mxu0 0.0
          %371 = vmatprep.subr.mxu0 0.0
          %372 = vmatpush1.msra.mxu0 0.0
          %373 = vmatprep.subr.mxu0 0.0
          %374 = vmatpush1.msra.mxu0 0.0
          %375 = vmatprep.subr.mxu0 0.0
          %376 = vmatpush1.msra.mxu0 0.0
          %377 = vmatprep.subr.mxu0 0.0
          %378 = vmatpush1.msra.mxu0 0.0
          %379 = vmatprep.subr.mxu0 0.0
          %380 = vmatpush1.msra.mxu0 0.0
          %381 = vmatprep.subr.mxu0 0.0
          %382 = vmatpush1.msra.mxu0 0.0
          %383 = vmatprep.subr.mxu0 0.0
          %384 = vmatpush1.msra.mxu0 0.0
          %385 = vmatprep.subr.mxu0 0.0
          %386 = vmatpush1.msra.mxu0 0.0
          %387 = vmatprep.subr.mxu0 0.0
          %388 = vmatpush1.msra.mxu0 0.0
          %389 = vmatprep.subr.mxu0 0.0
          %390 = vmatpush1.msra.mxu0 0.0
          %391 = vmatprep.subr.mxu0 0.0
          %392 = vmatpush1.msra.mxu0 0.0
          %393 = vmatprep.subr.mxu0 0.0
          %394 = vmatpush1.msra.mxu0 0.0
          %395 = vmatprep.subr.mxu0 0.0
          %396 = vmatpush1.msra.mxu0 0.0
          %397 = vmatprep.subr.mxu0 0.0
          %398 = vmatpush1.msra.mxu0 0.0
          %399 = vmatprep.subr.mxu0 0.0
          %400 = vmatpush1.msra.mxu0 0.0
          %401 = vmatprep.subr.mxu0 0.0
          %402 = vmatpush1.msra.mxu0 0.0
          %403 = vmatprep.subr.mxu0 0.0
          %404 = vmatpush1.msra.mxu0 0.0
          %405 = vmatprep.subr.mxu0 0.0
          %406 = vmatpush1.msra.mxu0 0.0
          %407 = vmatprep.subr.mxu0 0.0
          %408 = vmatpush1.msra.mxu0 0.0
          %409 = vmatprep.mubr.f32.mxu0 0.0
          %410 = vmatmul.mubr.f32.gmra.mrb[0].mxu0 %v340
          %v411 = vpop.f32.mrb[0].mxu0
          %v412 = vadd.f32 %v314, %v411
          %v413 = vpop.f32.mrb[0].mxu0
          %414 = vdwg.mxu0
          %v415 = vmax.f32 %v412, 0.0
          %416 = vmatprep.subr.mxu0 0.0
          %417 = vmatpush1.msra.mxu0 %v315
          %418 = vmatprep.subr.mxu0 0.0
          %419 = vmatpush1.msra.mxu0 %v316
          %420 = vmatprep.subr.mxu0 0.0
          %421 = vmatpush1.msra.mxu0 %v317
          %422 = vmatprep.subr.mxu0 0.0
          %423 = vmatpush1.msra.mxu0 %v318
          %424 = vmatprep.subr.mxu0 0.0
          %425 = vmatpush1.msra.mxu0 %v319
          %426 = vmatprep.subr.mxu0 0.0
          %427 = vmatpush1.msra.mxu0 %v320
          %428 = vmatprep.subr.mxu0 0.0
          %429 = vmatpush1.msra.mxu0 %v321
          %430 = vmatprep.subr.mxu0 0.0
          %431 = vmatpush1.msra.mxu0 %v322
          %432 = vmatprep.subr.mxu0 0.0
          %433 = vmatpush1.msra.mxu0 %v323
          %434 = vmatprep.subr.mxu0 0.0
          %435 = vmatpush1.msra.mxu0 %v324
          %436 = vmatprep.subr.mxu0 0.0
          %437 = vmatpush1.msra.mxu0 %v325
          %438 = vmatprep.subr.mxu0 0.0
          %439 = vmatpush1.msra.mxu0 %v326
          %440 = vmatprep.subr.mxu0 0.0
          %441 = vmatpush1.msra.mxu0 %v327
          %442 = vmatprep.subr.mxu0 0.0
          %443 = vmatpush1.msra.mxu0 %v328
          %444 = vmatprep.subr.mxu0 0.0
          %445 = vmatpush1.msra.mxu0 %v329
          %446 = vmatprep.subr.mxu0 0.0
          %447 = vmatpush1.msra.mxu0 %v330
          %448 = vmatprep.subr.mxu0 0.0
          %449 = vmatpush1.msra.mxu0 0.0
          %450 = vmatprep.subr.mxu0 0.0
          %451 = vmatpush1.msra.mxu0 0.0
          %452 = vmatprep.subr.mxu0 0.0
          %453 = vmatpush1.msra.mxu0 0.0
          %454 = vmatprep.subr.mxu0 0.0
          %455 = vmatpush1.msra.mxu0 0.0
          %456 = vmatprep.subr.mxu0 0.0
          %457 = vmatpush1.msra.mxu0 0.0
          %458 = vmatprep.subr.mxu0 0.0
          %459 = vmatpush1.msra.mxu0 0.0
          %460 = vmatprep.subr.mxu0 0.0
          %461 = vmatpush1.msra.mxu0 0.0
          %462 = vmatprep.subr.mxu0 0.0
          %463 = vmatpush1.msra.mxu0 0.0
          %464 = vmatprep.subr.mxu0 0.0
          %465 = vmatpush1.msra.mxu0 0.0
          %466 = vmatprep.subr.mxu0 0.0
          %467 = vmatpush1.msra.mxu0 0.0
          %468 = vmatprep.subr.mxu0 0.0
          %469 = vmatpush1.msra.mxu0 0.0
          %470 = vmatprep.subr.mxu0 0.0
          %471 = vmatpush1.msra.mxu0 0.0
          %472 = vmatprep.subr.mxu0 0.0
          %473 = vmatpush1.msra.mxu0 0.0
          %474 = vmatprep.subr.mxu0 0.0
          %475 = vmatpush1.msra.mxu0 0.0
          %476 = vmatprep.subr.mxu0 0.0
          %477 = vmatpush1.msra.mxu0 0.0
          %478 = vmatprep.subr.mxu0 0.0
          %479 = vmatpush1.msra.mxu0 0.0
          %480 = vmatprep.mubr.f32.mxu0 0.0
          %481 = vmatmul.mubr.f32.gmra.mrb[0].mxu0 %v415
          %v482 = vpop.f32.mrb[0].mxu0
          %v483 = vadd.f32 %v331, %v482
          %v484 = vpop.f32.mrb[0].mxu0
          %485 = vdwg.mxu0
          %v487 = vlaneseq
          %v488 = vshrl.u32 %v487, 7
          %v489 = vsub.s32 %v334, %v488
          %v490 = vrot.slane %v312, %v489
          %v491 = vsel %vm339, %v490, 0
          %493 = vmatprep.subr.mxu0 0.0
          %494 = vmatpush1.msra.mxu0 %v343
          %495 = vmatprep.subr.mxu0 0.0
          %496 = vmatpush1.msra.mxu0 0.0
          %497 = vmatprep.subr.mxu0 0.0
          %498 = vmatpush1.msra.mxu0 0.0
          %499 = vmatprep.subr.mxu0 0.0
          %500 = vmatpush1.msra.mxu0 0.0
          %501 = vmatprep.subr.mxu0 0.0
          %502 = vmatpush1.msra.mxu0 0.0
          %503 = vmatprep.subr.mxu0 0.0
          %504 = vmatpush1.msra.mxu0 0.0
          %505 = vmatprep.subr.mxu0 0.0
          %506 = vmatpush1.msra.mxu0 0.0
          %507 = vmatprep.subr.mxu0 0.0
          %508 = vmatpush1.msra.mxu0 0.0
          %509 = vmatprep.subr.mxu0 0.0
          %510 = vmatpush1.msra.mxu0 0.0
          %511 = vmatprep.subr.mxu0 0.0
          %512 = vmatpush1.msra.mxu0 0.0
          %513 = vmatprep.subr.mxu0 0.0
          %514 = vmatpush1.msra.mxu0 0.0
          %515 = vmatprep.subr.mxu0 0.0
          %516 = vmatpush1.msra.mxu0 0.0
          %517 = vmatprep.subr.mxu0 0.0
          %518 = vmatpush1.msra.mxu0 0.0
          %519 = vmatprep.subr.mxu0 0.0
          %520 = vmatpush1.msra.mxu0 0.0
          %521 = vmatprep.subr.mxu0 0.0
          %522 = vmatpush1.msra.mxu0 0.0
          %523 = vmatprep.subr.mxu0 0.0
          %524 = vmatpush1.msra.mxu0 0.0
          %525 = vmatprep.subr.mxu0 0.0
          %526 = vmatpush1.msra.mxu0 0.0
          %527 = vmatprep.subr.mxu0 0.0
          %528 = vmatpush1.msra.mxu0 0.0
          %529 = vmatprep.subr.mxu0 0.0
          %530 = vmatpush1.msra.mxu0 0.0
          %531 = vmatprep.subr.mxu0 0.0
          %532 = vmatpush1.msra.mxu0 0.0
          %533 = vmatprep.subr.mxu0 0.0
          %534 = vmatpush1.msra.mxu0 0.0
          %535 = vmatprep.subr.mxu0 0.0
          %536 = vmatpush1.msra.mxu0 0.0
          %537 = vmatprep.subr.mxu0 0.0
          %538 = vmatpush1.msra.mxu0 0.0
          %539 = vmatprep.subr.mxu0 0.0
          %540 = vmatpush1.msra.mxu0 0.0
          %541 = vmatprep.subr.mxu0 0.0
          %542 = vmatpush1.msra.mxu0 0.0
          %543 = vmatprep.subr.mxu0 0.0
          %544 = vmatpush1.msra.mxu0 0.0
          %545 = vmatprep.subr.mxu0 0.0
          %546 = vmatpush1.msra.mxu0 0.0
          %547 = vmatprep.subr.mxu0 0.0
          %548 = vmatpush1.msra.mxu0 0.0
          %549 = vmatprep.subr.mxu0 0.0
          %550 = vmatpush1.msra.mxu0 0.0
          %551 = vmatprep.subr.mxu0 0.0
          %552 = vmatpush1.msra.mxu0 0.0
          %553 = vmatprep.subr.mxu0 0.0
          %554 = vmatpush1.msra.mxu0 0.0
          %555 = vmatprep.subr.mxu0 0.0
          %556 = vmatpush1.msra.mxu0 0.0
          %557 = vmatprep.mubr.f32.mxu0 0.0
          %558 = vmatmul.mubr.f32.gmra.mrb[0].mxu0 %v491
          %v559 = vpop.f32.mrb[0].mxu0
          %v560 = vadd.f32 %v314, %v559
          %v561 = vpop.f32.mrb[0].mxu0
          %562 = vdwg.mxu0
          %v563 = vmax.f32 %v560, 0.0
          %564 = vmatprep.subr.mxu0 0.0
          %565 = vmatpush1.msra.mxu0 %v315
          %566 = vmatprep.subr.mxu0 0.0
          %567 = vmatpush1.msra.mxu0 %v316
          %568 = vmatprep.subr.mxu0 0.0
          %569 = vmatpush1.msra.mxu0 %v317
          %570 = vmatprep.subr.mxu0 0.0
          %571 = vmatpush1.msra.mxu0 %v318
          %572 = vmatprep.subr.mxu0 0.0
          %573 = vmatpush1.msra.mxu0 %v319
          %574 = vmatprep.subr.mxu0 0.0
          %575 = vmatpush1.msra.mxu0 %v320
          %576 = vmatprep.subr.mxu0 0.0
          %577 = vmatpush1.msra.mxu0 %v321
          %578 = vmatprep.subr.mxu0 0.0
          %579 = vmatpush1.msra.mxu0 %v322
          %580 = vmatprep.subr.mxu0 0.0
          %581 = vmatpush1.msra.mxu0 %v323
          %582 = vmatprep.subr.mxu0 0.0
          %583 = vmatpush1.msra.mxu0 %v324
          %584 = vmatprep.subr.mxu0 0.0
          %585 = vmatpush1.msra.mxu0 %v325
          %586 = vmatprep.subr.mxu0 0.0
          %587 = vmatpush1.msra.mxu0 %v326
          %588 = vmatprep.subr.mxu0 0.0
          %589 = vmatpush1.msra.mxu0 %v327
          %590 = vmatprep.subr.mxu0 0.0
          %591 = vmatpush1.msra.mxu0 %v328
          %592 = vmatprep.subr.mxu0 0.0
          %593 = vmatpush1.msra.mxu0 %v329
          %594 = vmatprep.subr.mxu0 0.0
          %595 = vmatpush1.msra.mxu0 %v330
          %596 = vmatprep.subr.mxu0 0.0
          %597 = vmatpush1.msra.mxu0 0.0
          %598 = vmatprep.subr.mxu0 0.0
          %599 = vmatpush1.msra.mxu0 0.0
          %600 = vmatprep.subr.mxu0 0.0
          %601 = vmatpush1.msra.mxu0 0.0
          %602 = vmatprep.subr.mxu0 0.0
          %603 = vmatpush1.msra.mxu0 0.0
          %604 = vmatprep.subr.mxu0 0.0
          %605 = vmatpush1.msra.mxu0 0.0
          %606 = vmatprep.subr.mxu0 0.0
          %607 = vmatpush1.msra.mxu0 0.0
          %608 = vmatprep.subr.mxu0 0.0
          %609 = vmatpush1.msra.mxu0 0.0
          %610 = vmatprep.subr.mxu0 0.0
          %611 = vmatpush1.msra.mxu0 0.0
          %612 = vmatprep.subr.mxu0 0.0
          %613 = vmatpush1.msra.mxu0 0.0
          %614 = vmatprep.subr.mxu0 0.0
          %615 = vmatpush1.msra.mxu0 0.0
          %616 = vmatprep.subr.mxu0 0.0
          %617 = vmatpush1.msra.mxu0 0.0
          %618 = vmatprep.subr.mxu0 0.0
          %619 = vmatpush1.msra.mxu0 0.0
          %620 = vmatprep.subr.mxu0 0.0
          %621 = vmatpush1.msra.mxu0 0.0
          %622 = vmatprep.subr.mxu0 0.0
          %623 = vmatpush1.msra.mxu0 0.0
          %624 = vmatprep.subr.mxu0 0.0
          %625 = vmatpush1.msra.mxu0 0.0
          %626 = vmatprep.subr.mxu0 0.0
          %627 = vmatpush1.msra.mxu0 0.0
          %628 = vmatprep.mubr.f32.mxu0 0.0
          %629 = vmatmul.mubr.f32.gmra.mrb[0].mxu0 %v563
          %v630 = vpop.f32.mrb[0].mxu0
          %v631 = vadd.f32 %v331, %v630
          %v632 = vpop.f32.mrb[0].mxu0
          %633 = vdwg.mxu0
          %v634 = vadd.f32 %v483, %v631
          %v635 = vxor.u32 %v634, 2147483648
          %v636 = vmul.f32 %v635, 1.442695
          %v637 = vpow.pop %v636
          %v638 = vadd.f32 %v637, 1.0
          %v639 = vrcp.pop %v638
          %v640 = vmul.f32 1.0, %v639
          %641 = vst [vmem:[%s282] sm:$0x1] %v640
        $region60: #{tpu_custom_call.1} parent=39 // pred_fallthru
          _
        %s642 = sand.u32 %s155, 1
        %s643 = scalar_lea.sflag [#allocation6], %s642
        %s644 = sand.u32 %s155, 1
        %s645 = scalar_lea.vmem [#allocation10], %s644
        // Predicated region
        $region61: #{tpu_custom_call.1} parent=39 // pred_check
          %p646 = pneg %p165
        $region62: #{tpu_custom_call.1} parent=39 // pred_check_branch
          %648 = sbr.rel (%p646) target = $region64
        $region63: #{tpu_custom_call.1} parent=39 // pred_region
          %s650 = ssub.s32 16, 16
          %651 = vsyncadd %s643, %s650
          %s652 = smul.addr %s27, 16
          %s653 = scalar_lea.hbm %s5, %s652
          %s655 = sshll.u32 %s645, 4
          %s656 = int_to_ptr.vmem [resolvable:$true] %s655
          %658 = dma.vmem_to_hbm [thread:$0]  %s656, 16, %s653, %s643
        $region64: #{tpu_custom_call.1} parent=39 // pred_fallthru
          _
      $region40: #{tpu_custom_call.1} parent=5 // pred_fallthru
        _
      %p659 = scmp.le.s32.totalorder 2, %s18
      // Predicated region
      $region65: #{tpu_custom_call.1} parent=5 // pred_check
        %p660 = pneg %p659
      $region66: #{tpu_custom_call.1} parent=5 // pred_check_branch
        %662 = sbr.rel (%p660) target = $region68
      $region67: #{tpu_custom_call.1} parent=5 // pred_region
        %s663 = ssub.s32 %s18, 2
        // Predicated region
        $region69: #{tpu_custom_call.1} parent=67 // pred_check
          %p664 = pneg %p171
        $region70: #{tpu_custom_call.1} parent=67 // pred_check_branch
          %666 = sbr.rel (%p664) target = $region72
        $region71: #{tpu_custom_call.1} parent=67 // pred_region
          %s667 = sand.u32 %s156, 1
          %s668 = scalar_lea.sflag [#allocation6], %s667
          %s669 = sand.u32 %s156, 1
          %s670 = scalar_lea.vmem [#allocation10], %s669
          %671 = dma.done %s668, 16
        $region72: #{tpu_custom_call.1} parent=67 // pred_fallthru
          _
      $region68: #{tpu_custom_call.1} parent=5 // pred_fallthru
        _
    $region6: #{tpu_custom_call.1} parent=1 // loop_footer
      %s22 = sadd.s32 1, %s18
    $region7: #{tpu_custom_call.1} parent=1 // loop_footer_branch
      %17 = sbr.rel target = $region3
    $region8: #{tpu_custom_call.1} parent=1 // loop_exit
      _
    %672 = vsyncpa [#allocation5], 1
    %s673 = scalar_lea.sflag [#allocation5], 1
    %674 = vsyncpa %s673, 1
    %675 = vsyncpa [#allocation8], 1
    %676 = vsyncpa [#allocation6], 1
    %s677 = scalar_lea.sflag [#allocation6], 1
    %678 = vsyncpa %s677, 1

</llo_original>
